<compile_context>
chip_gen: v7x
topology: tpu7x:2x2x1
jax: 0.10.0
libtpu: 0.0.40
codegen_flags: <defaults>
</compile_context>

<pallas_src>
import math

import jax
import jax.numpy as jnp
from jax.experimental import pallas as pl
from jax.experimental.pallas import tpu as pltpu


def attention_score_kernel(obs_i_ref, obs_j_ref, w1i_ref, w1j_ref, b1_ref,
                           w2_ref, b2_ref, o_ref):
    # obs_i_ref, obs_j_ref: [TILE_B, obs_dim]   (VMEM, double-buffered over the grid)
    # w1i_ref,  w1j_ref:    [obs_dim, hidden]   (VMEM, resident: constant index_map)
    # b1_ref:               [1, hidden]         (VMEM, resident)
    # w2_ref:               [1, hidden]         (VMEM, resident, lane-dense row)
    # b2_ref:               [1]                 (SMEM scalar)
    # o_ref:                [1, TILE_B]         (lane-dense output row)
    h = (jnp.dot(obs_i_ref[...], w1i_ref[...], preferred_element_type=jnp.float32)
         + jnp.dot(obs_j_ref[...], w1j_ref[...], preferred_element_type=jnp.float32)
         + b1_ref[...])
    h = jnp.maximum(h, 0.0)                                    # ReLU on the VPU
    # Second layer: contract hidden against the lane-dense w2 row, producing the
    # scores directly as a lane-dense [1, TILE_B] row (== (h @ w2).T). Avoids the
    # N=1 degenerate MXU pass and all masked lane-width-1 loads/stores.
    score = jax.lax.dot_general(
        w2_ref[...], h,
        dimension_numbers=(((1,), (1,)), ((), ())),            # contract hidden dim
        preferred_element_type=jnp.float32)                    # [1, TILE_B]
    o_ref[...] = (score + b2_ref[0]).astype(o_ref.dtype)


def attention_module_forward(obs_i, obs_j, w1, b1, w2, b2, *, max_tile_b=512):
    """Pallas implementation of AttentionModule.forward.

    obs_i, obs_j: [B, obs_dim] float32
    w1: [2*obs_dim, hidden], b1: [hidden], w2: [hidden, 1], b2: [1]
    returns:      [B, 1] float32
    """
    B, obs_dim = obs_i.shape
    hidden = w1.shape[1]

    # Fold the concatenation into the kernel: split w1 into the obs_i / obs_j halves.
    w1_i = w1[:obs_dim]
    w1_j = w1[obs_dim:]
    b1_row = b1.reshape(1, hidden)
    w2_row = jnp.reshape(w2, (1, hidden))      # lane-dense row instead of [hidden, 1]
    b2_s = jnp.reshape(b2, (1,))               # scalar, lives in SMEM

    # Batch tiling: single full-array block for small B; otherwise (8,128)-aligned
    # row tiles so both the obs blocks and the output row are unmasked vector traffic.
    if B <= max_tile_b:
        tile_b = B
        b_pad = B
    else:
        tile_b = max_tile_b                    # multiple of 8 and 128
        b_pad = math.ceil(B / tile_b) * tile_b
        pad = b_pad - B
        if pad:
            obs_i = jnp.pad(obs_i, ((0, pad), (0, 0)))
            obs_j = jnp.pad(obs_j, ((0, pad), (0, 0)))
    num_tiles = b_pad // tile_b

    out = pl.pallas_call(
        attention_score_kernel,
        out_shape=jax.ShapeDtypeStruct((1, b_pad), jnp.float32),
        grid=(num_tiles,),
        in_specs=[
            pl.BlockSpec((tile_b, obs_dim), lambda i: (i, 0)),   # obs_i tile
            pl.BlockSpec((tile_b, obs_dim), lambda i: (i, 0)),   # obs_j tile
            pl.BlockSpec((obs_dim, hidden), lambda i: (0, 0)),   # w1 top half (resident)
            pl.BlockSpec((obs_dim, hidden), lambda i: (0, 0)),   # w1 bottom half (resident)
            pl.BlockSpec((1, hidden), lambda i: (0, 0)),         # b1 (resident)
            pl.BlockSpec((1, hidden), lambda i: (0, 0)),         # w2 row (resident)
            pl.BlockSpec(memory_space=pltpu.MemorySpace.SMEM),   # b2 scalar
        ],
        out_specs=pl.BlockSpec((1, tile_b), lambda i: (0, i)),   # lane-dense score row
        compiler_params=pltpu.CompilerParams(
            dimension_semantics=("parallel",)),  # v7x: shard batch tiles across 2 TCs
    )(obs_i, obs_j, w1_i, w1_j, b1_row, w2_row, b2_s)

    # (1, b_pad) -> (b_pad, 1) -> drop padding rows.
    return out.reshape(b_pad, 1)[:B]


def _init_params(key, obs_dim, hidden_dim):
    # Deterministic synthetic init (PyTorch-style uniform bounds), stored as
    # [in, out] so the kernel computes x @ W + b.
    k1, k2, k3, k4 = jax.random.split(key, 4)
    fan_in1 = obs_dim * 2
    bound1 = 1.0 / jnp.sqrt(fan_in1)
    w1 = jax.random.uniform(k1, (fan_in1, hidden_dim), jnp.float32, -bound1, bound1)
    b1 = jax.random.uniform(k2, (hidden_dim,), jnp.float32, -bound1, bound1)
    bound2 = 1.0 / jnp.sqrt(hidden_dim)
    w2 = jax.random.uniform(k3, (hidden_dim, 1), jnp.float32, -bound2, bound2)
    b2 = jax.random.uniform(k4, (1,), jnp.float32, -bound2, bound2)
    return w1, b1, w2, b2


def _reference_forward(obs_i, obs_j, w1, b1, w2, b2):
    x = jnp.concatenate([obs_i, obs_j], axis=-1)
    h = jnp.maximum(x @ w1 + b1, 0.0)
    return h @ w2 + b2


if __name__ == "__main__":
    key = jax.random.PRNGKey(0)
    k_params, k_i, k_j, k_i2, k_j2 = jax.random.split(key, 5)

    batch = 8
    obs_dim = 16
    hidden_dim = 32

    obs_i = jax.random.normal(k_i, (batch, obs_dim), jnp.float32)
    obs_j = jax.random.normal(k_j, (batch, obs_dim), jnp.float32)
    w1, b1, w2, b2 = _init_params(k_params, obs_dim, hidden_dim)

    # Small-batch path (single full-array block).
    score = attention_module_forward(obs_i, obs_j, w1, b1, w2, b2)
    score = jax.block_until_ready(score)
    ref = _reference_forward(obs_i, obs_j, w1, b1, w2, b2)
    assert score.shape == (batch, 1)
    assert jnp.allclose(score, ref, atol=1e-5, rtol=1e-5)

    # Batched path: non-multiple batch -> padding + multi-step grid (pipelined tiles).
    batch2 = 300
    obs_i2 = jax.random.normal(k_i2, (batch2, obs_dim), jnp.float32)
    obs_j2 = jax.random.normal(k_j2, (batch2, obs_dim), jnp.float32)
    score2 = attention_module_forward(obs_i2, obs_j2, w1, b1, w2, b2, max_tile_b=128)
    score2 = jax.block_until_ready(score2)
    ref2 = _reference_forward(obs_i2, obs_j2, w1, b1, w2, b2)
    assert score2.shape == (batch2, 1)
    assert jnp.allclose(score2, ref2, atol=1e-5, rtol=1e-5)

    print("KERNEL_OK")
</pallas_src>

<mosaic_0001>
module attributes {stable_mosaic.version = 11 : i64} {
  func.func @attention_score_kernel(%arg0: i32, %arg1: memref<8x16xf32, #tpu.memory_space<vmem>>, %arg2: memref<8x16xf32, #tpu.memory_space<vmem>>, %arg3: memref<16x32xf32, #tpu.memory_space<vmem>>, %arg4: memref<16x32xf32, #tpu.memory_space<vmem>>, %arg5: memref<1x32xf32, #tpu.memory_space<vmem>>, %arg6: memref<1x32xf32, #tpu.memory_space<vmem>>, %arg7: memref<1xf32, #tpu.memory_space<smem>>, %arg8: memref<1x8xf32, #tpu.memory_space<vmem>>) attributes {dimension_semantics = [#tpu.dimension_semantics<parallel>], iteration_bounds = array<i64: 1>, scalar_prefetch = 0 : i64, scratch_operands = 0 : i64, tpu.core_type = #tpu.core_type<tc>, window_params = [{transform_indices = @transform_0, window_bounds = array<i64: 8, 16>}, {transform_indices = @transform_1, window_bounds = array<i64: 8, 16>}, {pipeline_mode = #tpu.pipeline_mode<synchronous>, transform_indices = @transform_2, window_bounds = array<i64: 16, 32>}, {pipeline_mode = #tpu.pipeline_mode<synchronous>, transform_indices = @transform_3, window_bounds = array<i64: 16, 32>}, {pipeline_mode = #tpu.pipeline_mode<synchronous>, transform_indices = @transform_4, window_bounds = array<i64: 1, 32>}, {pipeline_mode = #tpu.pipeline_mode<synchronous>, transform_indices = @transform_5, window_bounds = array<i64: 1, 32>}, {transform_indices = @transform_6, window_bounds = array<i64: 1>}, {transform_indices = @transform_7, window_bounds = array<i64: 1, 8>}]} {
    %c0 = arith.constant 0 : index
    %c0_0 = arith.constant 0 : index
    %0 = vector.load %arg1[%c0, %c0_0] : memref<8x16xf32, #tpu.memory_space<vmem>>, vector<8x16xf32>
    %c0_1 = arith.constant 0 : index
    %c0_2 = arith.constant 0 : index
    %1 = vector.load %arg3[%c0_1, %c0_2] : memref<16x32xf32, #tpu.memory_space<vmem>>, vector<16x32xf32>
    %cst = arith.constant dense<0.000000e+00> : vector<8x32xf32>
    %2 = tpu.matmul %0, %1, %cst {dimension_numbers = #tpu.dot_dimension_numbers<[1], [0], [0], [1], [0, 0, 1, 1], [], []>} : vector<8x16xf32>, vector<16x32xf32>, vector<8x32xf32> -> vector<8x32xf32>
    %c0_3 = arith.constant 0 : index
    %c0_4 = arith.constant 0 : index
    %3 = vector.load %arg2[%c0_3, %c0_4] : memref<8x16xf32, #tpu.memory_space<vmem>>, vector<8x16xf32>
    %c0_5 = arith.constant 0 : index
    %c0_6 = arith.constant 0 : index
    %4 = vector.load %arg4[%c0_5, %c0_6] : memref<16x32xf32, #tpu.memory_space<vmem>>, vector<16x32xf32>
    %cst_7 = arith.constant dense<0.000000e+00> : vector<8x32xf32>
    %5 = tpu.matmul %3, %4, %cst_7 {dimension_numbers = #tpu.dot_dimension_numbers<[1], [0], [0], [1], [0, 0, 1, 1], [], []>} : vector<8x16xf32>, vector<16x32xf32>, vector<8x32xf32> -> vector<8x32xf32>
    %6 = arith.addf %2, %5 : vector<8x32xf32>
    %c0_8 = arith.constant 0 : index
    %c0_9 = arith.constant 0 : index
    %7 = vector.load %arg5[%c0_8, %c0_9] : memref<1x32xf32, #tpu.memory_space<vmem>>, vector<1x32xf32>
    %8 = vector.broadcast %7 : vector<1x32xf32> to vector<8x32xf32>
    %9 = arith.addf %6, %8 : vector<8x32xf32>
    %cst_10 = arith.constant 0.000000e+00 : f32
    %10 = vector.broadcast %cst_10 : f32 to vector<8x32xf32>
    %11 = arith.maximumf %9, %10 : vector<8x32xf32>
    %c0_11 = arith.constant 0 : index
    %c0_12 = arith.constant 0 : index
    %12 = vector.load %arg6[%c0_11, %c0_12] : memref<1x32xf32, #tpu.memory_space<vmem>>, vector<1x32xf32>
    %cst_13 = arith.constant dense<0.000000e+00> : vector<1x8xf32>
    %13 = tpu.matmul %12, %11, %cst_13 {dimension_numbers = #tpu.dot_dimension_numbers<[1], [1], [0], [0], [0, 0, 1, 0], [], []>} : vector<1x32xf32>, vector<8x32xf32>, vector<1x8xf32> -> vector<1x8xf32>
    %c0_14 = arith.constant 0 : index
    %14 = memref.load %arg7[%c0_14] : memref<1xf32, #tpu.memory_space<smem>>
    %15 = vector.broadcast %14 : f32 to vector<1x8xf32>
    %16 = arith.addf %13, %15 : vector<1x8xf32>
    %c0_15 = arith.constant 0 : index
    %c0_16 = arith.constant 0 : index
    %17 = vector.load %arg8[%c0_15, %c0_16] : memref<1x8xf32, #tpu.memory_space<vmem>>, vector<1x8xf32>
    tpu.vector_store %arg8[%c0_15, %c0_16], %16 {strides = array<i32>} : memref<1x8xf32, #tpu.memory_space<vmem>>, vector<1x8xf32>,
    return
  }
  func.func @transform_0(%arg0: i32) -> (i32, i32) {
    %c0_i32 = arith.constant 0 : i32
    %c0_i32_0 = arith.constant 0 : i32
    return %arg0, %c0_i32 : i32, i32
  }
  func.func @transform_1(%arg0: i32) -> (i32, i32) {
    %c0_i32 = arith.constant 0 : i32
    %c0_i32_0 = arith.constant 0 : i32
    return %arg0, %c0_i32 : i32, i32
  }
  func.func @transform_2(%arg0: i32) -> (i32, i32) {
    %c0_i32 = arith.constant 0 : i32
    %c0_i32_0 = arith.constant 0 : i32
    %c0_i32_1 = arith.constant 0 : i32
    return %c0_i32, %c0_i32_0 : i32, i32
  }
  func.func @transform_3(%arg0: i32) -> (i32, i32) {
    %c0_i32 = arith.constant 0 : i32
    %c0_i32_0 = arith.constant 0 : i32
    %c0_i32_1 = arith.constant 0 : i32
    return %c0_i32, %c0_i32_0 : i32, i32
  }
  func.func @transform_4(%arg0: i32) -> (i32, i32) {
    %c0_i32 = arith.constant 0 : i32
    %c0_i32_0 = arith.constant 0 : i32
    %c0_i32_1 = arith.constant 0 : i32
    return %c0_i32, %c0_i32_0 : i32, i32
  }
  func.func @transform_5(%arg0: i32) -> (i32, i32) {
    %c0_i32 = arith.constant 0 : i32
    %c0_i32_0 = arith.constant 0 : i32
    %c0_i32_1 = arith.constant 0 : i32
    return %c0_i32, %c0_i32_0 : i32, i32
  }
  func.func @transform_6(%arg0: i32) -> i32 {
    %c0_i32 = arith.constant 0 : i32
    %c0_i32_0 = arith.constant 0 : i32
    return %c0_i32 : i32
  }
  func.func @transform_7(%arg0: i32) -> (i32, i32) {
    %c0_i32 = arith.constant 0 : i32
    %c0_i32_0 = arith.constant 0 : i32
    return %c0_i32, %arg0 : i32, i32
  }
}

</mosaic_0001>

<llo_original>
// kernel: tpu_custom_call.1
$region0: #{tpu_custom_call.1}
  #allocation0 [shape = 'u32[]', space=smem, size = 0x4, offset = 0x4, fixed_abs, tag = 'smem constant byte address 0x4 - core index']
  #allocation1 [shape = 'u32[144,128]{1,0:T(1,128)}', space=vmem, size = 0x12000, scoped, tag = 'internal scratch']
  #allocation2 [shape = 'f32[1]{0:T(128)S(6)}', space=smem, size = 0x200, scoped, tag = 'scoped memory for tpu_custom_call.1']
  %s0 = inlined_call_operand.hbm [shape: f32[8,16], index: 0, kind: input, shape index: {}]
  %s1 = inlined_call_operand.hbm [shape: f32[8,16], index: 1, kind: input, shape index: {}]
  %s2 = inlined_call_operand.hbm [shape: f32[16,32], index: 2, kind: input, shape index: {}]
  %s3 = inlined_call_operand.hbm [shape: f32[16,32], index: 3, kind: input, shape index: {}]
  %s4 = inlined_call_operand.vmem [shape: f32[1,32], index: 4, kind: input, shape index: {}]
  %s5 = inlined_call_operand.vmem [shape: f32[1,32], index: 5, kind: input, shape index: {}]
  %s6 = inlined_call_operand.<no memory space> [shape: f32[1], index: 6, kind: input, shape index: {}]
  %s7 = inlined_call_operand.hbm [shape: f32[1,8], index: 7, kind: output, shape index: {}]
  %s8 = sld [smem:[#allocation0]]
  $region54: #{tpu_custom_call.1} parent=0
    _
  %s10 = ssub.s32 1, %s8
  %s11 = scalar_select 0, %s10, %s8
  %12 = sst [smem:[#allocation2]] %s6
  $region1: #{tpu_custom_call.1} parent=0
    #allocation3 [shape = 'u8[4096]{0}', space=vmem, size = 0x1000, scoped, tag = 'input window, operand 0, single buffered']
    #allocation4 [shape = 's32[1]{0}', space=sflag, size = 0x4, scoped, tag = 'scoped memory for tpu_custom_call.1']
    #allocation5 [shape = 's32[1]{0}', space=sflag, size = 0x4, scoped, tag = 'scoped memory for tpu_custom_call.1']
    #allocation6 [shape = 'u8[4096]{0}', space=vmem, size = 0x1000, scoped, tag = 'input window, operand 1, single buffered']
    #allocation7 [shape = 's32[1]{0}', space=sflag, size = 0x4, scoped, tag = 'scoped memory for tpu_custom_call.1']
    #allocation8 [shape = 'u8[8192]{0}', space=vmem, size = 0x2000, scoped, tag = 'input window, operand 2, single buffered']
    #allocation9 [shape = 'u8[8192]{0}', space=vmem, size = 0x2000, scoped, tag = 'input window, operand 3, single buffered']
    #allocation10 [shape = 's32[1]{0}', space=sflag, size = 0x4, scoped, tag = 'scoped memory for tpu_custom_call.1']
    #allocation11 [shape = 'u8[512]{0}', space=vmem, size = 0x400, scoped, tag = 'output window, operand 0, single buffered']
    %13 = vsyncpa [#allocation4], 0
    %14 = vsyncpa [#allocation7], 0
    %15 = vsyncpa [#allocation10], 0
    %16 = vsyncpa [#allocation5], 0
    // Predicated region
    $region2: #{tpu_custom_call.1} parent=1 // pred_check
      _
    $region3: #{tpu_custom_call.1} parent=1 // pred_check_branch
      %18 = sbr.rel (0) target = $region5
    $region4: #{tpu_custom_call.1} parent=1 // pred_region
      %s20 = ssub.s32 128, 128
      %21 = vsyncadd [#allocation4], %s20
      %s23 = sshll.u32 [#allocation3], 4
      %s24 = int_to_ptr.vmem [resolvable:$true] %s23
      %26 = dma.hbm_to_vmem [thread:$0]  %s0, 128, %s24, [#allocation4]
    $region5: #{tpu_custom_call.1} parent=1 // pred_fallthru
      _
    // Predicated region
    $region6: #{tpu_custom_call.1} parent=1 // pred_check
      _
    $region7: #{tpu_custom_call.1} parent=1 // pred_check_branch
      %28 = sbr.rel (0) target = $region9
    $region8: #{tpu_custom_call.1} parent=1 // pred_region
      %s30 = ssub.s32 128, 128
      %31 = vsyncadd [#allocation7], %s30
      %s33 = sshll.u32 [#allocation6], 4
      %s34 = int_to_ptr.vmem [resolvable:$true] %s33
      %36 = dma.hbm_to_vmem [thread:$0]  %s1, 128, %s34, [#allocation7]
    $region9: #{tpu_custom_call.1} parent=1 // pred_fallthru
      _
    // Predicated region
    $region10: #{tpu_custom_call.1} parent=1 // pred_check
      _
    $region11: #{tpu_custom_call.1} parent=1 // pred_check_branch
      %38 = sbr.rel (0) target = $region13
    $region12: #{tpu_custom_call.1} parent=1 // pred_region
      %s40 = ssub.s32 256, 256
      %41 = vsyncadd [#allocation7], %s40
      %s42 = sshll.u32 [#allocation8], 4
      %s43 = int_to_ptr.vmem [resolvable:$true] %s42
      %48 = dma.hbm_to_vmem [thread:$0]  %s2, 256, %s43, [#allocation7], 128, 128, 8
    $region13: #{tpu_custom_call.1} parent=1 // pred_fallthru
      _
    // Predicated region
    $region14: #{tpu_custom_call.1} parent=1 // pred_check
      _
    $region15: #{tpu_custom_call.1} parent=1 // pred_check_branch
      %50 = sbr.rel (0) target = $region17
    $region16: #{tpu_custom_call.1} parent=1 // pred_region
      %s52 = ssub.s32 256, 256
      %53 = vsyncadd [#allocation10], %s52
      %s54 = sshll.u32 [#allocation9], 4
      %s55 = int_to_ptr.vmem [resolvable:$true] %s54
      %60 = dma.hbm_to_vmem [thread:$0]  %s3, 256, %s55, [#allocation10], 128, 128, 8
    $region17: #{tpu_custom_call.1} parent=1 // pred_fallthru
      _
    // Predicated region
    $region18: #{tpu_custom_call.1} parent=1 // pred_check
      _
    $region19: #{tpu_custom_call.1} parent=1 // pred_check_branch
      %62 = sbr.rel (0) target = $region21
    $region20: #{tpu_custom_call.1} parent=1 // pred_region
      _
    $region21: #{tpu_custom_call.1} parent=1 // pred_fallthru
      _
    // Predicated region
    $region22: #{tpu_custom_call.1} parent=1 // pred_check
      _
    $region23: #{tpu_custom_call.1} parent=1 // pred_check_branch
      %64 = sbr.rel (0) target = $region25
    $region24: #{tpu_custom_call.1} parent=1 // pred_region
      _
    $region25: #{tpu_custom_call.1} parent=1 // pred_fallthru
      _
    // Predicated region
    $region26: #{tpu_custom_call.1} parent=1 // pred_check
      _
    $region27: #{tpu_custom_call.1} parent=1 // pred_check_branch
      %66 = sbr.rel (0) target = $region29
    $region28: #{tpu_custom_call.1} parent=1 // pred_region
      _
    $region29: #{tpu_custom_call.1} parent=1 // pred_fallthru
      _
    // Predicated region
    $region30: #{tpu_custom_call.1} parent=1 // pred_check
      _
    $region31: #{tpu_custom_call.1} parent=1 // pred_check_branch
      %68 = sbr.rel (0) target = $region33
    $region32: #{tpu_custom_call.1} parent=1 // pred_region
      %69 = dma.done [#allocation4], 128
    $region33: #{tpu_custom_call.1} parent=1 // pred_fallthru
      _
    // Predicated region
    $region34: #{tpu_custom_call.1} parent=1 // pred_check
      _
    $region35: #{tpu_custom_call.1} parent=1 // pred_check_branch
      %71 = sbr.rel (0) target = $region37
    $region36: #{tpu_custom_call.1} parent=1 // pred_region
      %72 = dma.done [#allocation7], 128
    $region37: #{tpu_custom_call.1} parent=1 // pred_fallthru
      _
    // Predicated region
    $region38: #{tpu_custom_call.1} parent=1 // pred_check
      _
    $region39: #{tpu_custom_call.1} parent=1 // pred_check_branch
      %74 = sbr.rel (0) target = $region41
    $region40: #{tpu_custom_call.1} parent=1 // pred_region
      %75 = dma.done [#allocation7], 256
    $region41: #{tpu_custom_call.1} parent=1 // pred_fallthru
      _
    // Predicated region
    $region42: #{tpu_custom_call.1} parent=1 // pred_check
      _
    $region43: #{tpu_custom_call.1} parent=1 // pred_check_branch
      %77 = sbr.rel (0) target = $region45
    $region44: #{tpu_custom_call.1} parent=1 // pred_region
      %78 = dma.done [#allocation10], 256
    $region45: #{tpu_custom_call.1} parent=1 // pred_fallthru
      _
    %v79 = vld [vmem:[#allocation3] sm:$0xff]
    %v80 = vld [vmem:[#allocation8] sm:$0xff]
    %v81 = vld [vmem:[#allocation8 + $0x8] sm:$0xff]
    %v82 = vld [vmem:[#allocation6] sm:$0xff]
    %v83 = vld [vmem:[#allocation9] sm:$0xff]
    %v84 = vld [vmem:[#allocation9 + $0x8] sm:$0xff]
    %vm85 = vcmask 130048
    %v87 = vsel %vm85, %v82, 0
    %89 = vmatprep.subr.mxu0 0.0
    %90 = vmatpush1.msra.mxu0 %v83
    %91 = vmatprep.subr.mxu0 0.0
    %92 = vmatpush1.msra.mxu0 %v84
    %93 = vmatprep.subr.mxu0 0.0
    %94 = vmatpush1.msra.mxu0 0.0
    %95 = vmatprep.subr.mxu0 0.0
    %96 = vmatpush1.msra.mxu0 0.0
    %97 = vmatprep.subr.mxu0 0.0
    %98 = vmatpush1.msra.mxu0 0.0
    %99 = vmatprep.subr.mxu0 0.0
    %100 = vmatpush1.msra.mxu0 0.0
    %101 = vmatprep.subr.mxu0 0.0
    %102 = vmatpush1.msra.mxu0 0.0
    %103 = vmatprep.subr.mxu0 0.0
    %104 = vmatpush1.msra.mxu0 0.0
    %105 = vmatprep.subr.mxu0 0.0
    %106 = vmatpush1.msra.mxu0 0.0
    %107 = vmatprep.subr.mxu0 0.0
    %108 = vmatpush1.msra.mxu0 0.0
    %109 = vmatprep.subr.mxu0 0.0
    %110 = vmatpush1.msra.mxu0 0.0
    %111 = vmatprep.subr.mxu0 0.0
    %112 = vmatpush1.msra.mxu0 0.0
    %113 = vmatprep.subr.mxu0 0.0
    %114 = vmatpush1.msra.mxu0 0.0
    %115 = vmatprep.subr.mxu0 0.0
    %116 = vmatpush1.msra.mxu0 0.0
    %117 = vmatprep.subr.mxu0 0.0
    %118 = vmatpush1.msra.mxu0 0.0
    %119 = vmatprep.subr.mxu0 0.0
    %120 = vmatpush1.msra.mxu0 0.0
    %121 = vmatprep.subr.mxu0 0.0
    %122 = vmatpush1.msra.mxu0 0.0
    %123 = vmatprep.subr.mxu0 0.0
    %124 = vmatpush1.msra.mxu0 0.0
    %125 = vmatprep.subr.mxu0 0.0
    %126 = vmatpush1.msra.mxu0 0.0
    %127 = vmatprep.subr.mxu0 0.0
    %128 = vmatpush1.msra.mxu0 0.0
    %129 = vmatprep.subr.mxu0 0.0
    %130 = vmatpush1.msra.mxu0 0.0
    %131 = vmatprep.subr.mxu0 0.0
    %132 = vmatpush1.msra.mxu0 0.0
    %133 = vmatprep.subr.mxu0 0.0
    %134 = vmatpush1.msra.mxu0 0.0
    %135 = vmatprep.subr.mxu0 0.0
    %136 = vmatpush1.msra.mxu0 0.0
    %137 = vmatprep.subr.mxu0 0.0
    %138 = vmatpush1.msra.mxu0 0.0
    %139 = vmatprep.subr.mxu0 0.0
    %140 = vmatpush1.msra.mxu0 0.0
    %141 = vmatprep.subr.mxu0 0.0
    %142 = vmatpush1.msra.mxu0 0.0
    %143 = vmatprep.subr.mxu0 0.0
    %144 = vmatpush1.msra.mxu0 0.0
    %145 = vmatprep.subr.mxu0 0.0
    %146 = vmatpush1.msra.mxu0 0.0
    %147 = vmatprep.subr.mxu0 0.0
    %148 = vmatpush1.msra.mxu0 0.0
    %149 = vmatprep.subr.mxu0 0.0
    %150 = vmatpush1.msra.mxu0 0.0
    %151 = vmatprep.subr.mxu0 0.0
    %152 = vmatpush1.msra.mxu0 0.0
    %153 = vmatprep.mubr.f32.mxu0 0.0
    %154 = vmatmul.mubr.f32.gmra.mrb[0].mxu0 %v87
    %v155 = vpop.f32.mrb[0].mxu0
    %v156 = vadd.f32 0.0, %v155
    %v157 = vpop.f32.mrb[0].mxu0
    %158 = vdwg.mxu0
    %v160 = vsel %vm85, %v79, 0
    %162 = vmatprep.subr.mxu0 0.0
    %163 = vmatpush1.msra.mxu0 %v80
    %164 = vmatprep.subr.mxu0 0.0
    %165 = vmatpush1.msra.mxu0 %v81
    %166 = vmatprep.subr.mxu0 0.0
    %167 = vmatpush1.msra.mxu0 0.0
    %168 = vmatprep.subr.mxu0 0.0
    %169 = vmatpush1.msra.mxu0 0.0
    %170 = vmatprep.subr.mxu0 0.0
    %171 = vmatpush1.msra.mxu0 0.0
    %172 = vmatprep.subr.mxu0 0.0
    %173 = vmatpush1.msra.mxu0 0.0
    %174 = vmatprep.subr.mxu0 0.0
    %175 = vmatpush1.msra.mxu0 0.0
    %176 = vmatprep.subr.mxu0 0.0
    %177 = vmatpush1.msra.mxu0 0.0
    %178 = vmatprep.subr.mxu0 0.0
    %179 = vmatpush1.msra.mxu0 0.0
    %180 = vmatprep.subr.mxu0 0.0
    %181 = vmatpush1.msra.mxu0 0.0
    %182 = vmatprep.subr.mxu0 0.0
    %183 = vmatpush1.msra.mxu0 0.0
    %184 = vmatprep.subr.mxu0 0.0
    %185 = vmatpush1.msra.mxu0 0.0
    %186 = vmatprep.subr.mxu0 0.0
    %187 = vmatpush1.msra.mxu0 0.0
    %188 = vmatprep.subr.mxu0 0.0
    %189 = vmatpush1.msra.mxu0 0.0
    %190 = vmatprep.subr.mxu0 0.0
    %191 = vmatpush1.msra.mxu0 0.0
    %192 = vmatprep.subr.mxu0 0.0
    %193 = vmatpush1.msra.mxu0 0.0
    %194 = vmatprep.subr.mxu0 0.0
    %195 = vmatpush1.msra.mxu0 0.0
    %196 = vmatprep.subr.mxu0 0.0
    %197 = vmatpush1.msra.mxu0 0.0
    %198 = vmatprep.subr.mxu0 0.0
    %199 = vmatpush1.msra.mxu0 0.0
    %200 = vmatprep.subr.mxu0 0.0
    %201 = vmatpush1.msra.mxu0 0.0
    %202 = vmatprep.subr.mxu0 0.0
    %203 = vmatpush1.msra.mxu0 0.0
    %204 = vmatprep.subr.mxu0 0.0
    %205 = vmatpush1.msra.mxu0 0.0
    %206 = vmatprep.subr.mxu0 0.0
    %207 = vmatpush1.msra.mxu0 0.0
    %208 = vmatprep.subr.mxu0 0.0
    %209 = vmatpush1.msra.mxu0 0.0
    %210 = vmatprep.subr.mxu0 0.0
    %211 = vmatpush1.msra.mxu0 0.0
    %212 = vmatprep.subr.mxu0 0.0
    %213 = vmatpush1.msra.mxu0 0.0
    %214 = vmatprep.subr.mxu0 0.0
    %215 = vmatpush1.msra.mxu0 0.0
    %216 = vmatprep.subr.mxu0 0.0
    %217 = vmatpush1.msra.mxu0 0.0
    %218 = vmatprep.subr.mxu0 0.0
    %219 = vmatpush1.msra.mxu0 0.0
    %220 = vmatprep.subr.mxu0 0.0
    %221 = vmatpush1.msra.mxu0 0.0
    %222 = vmatprep.subr.mxu0 0.0
    %223 = vmatpush1.msra.mxu0 0.0
    %224 = vmatprep.subr.mxu0 0.0
    %225 = vmatpush1.msra.mxu0 0.0
    %226 = vmatprep.mubr.f32.mxu0 0.0
    %227 = vmatmul.mubr.f32.gmra.mrb[0].mxu0 %v160
    %v228 = vpop.f32.mrb[0].mxu0
    %v229 = vadd.f32 %v156, %v228
    %v230 = vpop.f32.mrb[0].mxu0
    %231 = vdwg.mxu0
    %v232 = vld [vmem:[%s4] sm:$0x1]
    %v234 = vlaneseq
    %v235 = vshrl.u32 %v234, 7
    %v236 = vsub.s32 0, %v235
    %v237 = vrot.slane %v232, %v236
    %v239 = vadd.f32 %v229, %v237
    %v240 = vmax.f32 %v239, 0.0
    %v241 = vld [vmem:[%s5] sm:$0x1]
    %s242 = sld [smem:[#allocation2]]
    %v243 = vstv %s242
    %vm244 = vcmask 261120
    %v246 = vsel %vm244, %v241, 0
    %v249 = vsel %vm244, %v240, 0
    %251 = vmatprep.subr.mxu0 0.0
    %252 = vmatpush1.xpose.msra.mxu0 %v249
    %253 = vmatprep.subr.mxu0 0.0
    %254 = vmatpush1.xpose.msra.mxu0 0.0
    %255 = vmatprep.subr.mxu0 0.0
    %256 = vmatpush1.xpose.msra.mxu0 0.0
    %257 = vmatprep.subr.mxu0 0.0
    %258 = vmatpush1.xpose.msra.mxu0 0.0
    %259 = vmatprep.subr.mxu0 0.0
    %260 = vmatpush1.xpose.msra.mxu0 0.0
    %261 = vmatprep.subr.mxu0 0.0
    %262 = vmatpush1.xpose.msra.mxu0 0.0
    %263 = vmatprep.subr.mxu0 0.0
    %264 = vmatpush1.xpose.msra.mxu0 0.0
    %265 = vmatprep.subr.mxu0 0.0
    %266 = vmatpush1.xpose.msra.mxu0 0.0
    %267 = vmatprep.subr.mxu0 0.0
    %268 = vmatpush1.xpose.msra.mxu0 0.0
    %269 = vmatprep.subr.mxu0 0.0
    %270 = vmatpush1.xpose.msra.mxu0 0.0
    %271 = vmatprep.subr.mxu0 0.0
    %272 = vmatpush1.xpose.msra.mxu0 0.0
    %273 = vmatprep.subr.mxu0 0.0
    %274 = vmatpush1.xpose.msra.mxu0 0.0
    %275 = vmatprep.subr.mxu0 0.0
    %276 = vmatpush1.xpose.msra.mxu0 0.0
    %277 = vmatprep.subr.mxu0 0.0
    %278 = vmatpush1.xpose.msra.mxu0 0.0
    %279 = vmatprep.subr.mxu0 0.0
    %280 = vmatpush1.xpose.msra.mxu0 0.0
    %281 = vmatprep.subr.mxu0 0.0
    %282 = vmatpush1.xpose.msra.mxu0 0.0
    %283 = vmatprep.subr.mxu0 0.0
    %284 = vmatpush1.xpose.msra.mxu0 0.0
    %285 = vmatprep.subr.mxu0 0.0
    %286 = vmatpush1.xpose.msra.mxu0 0.0
    %287 = vmatprep.subr.mxu0 0.0
    %288 = vmatpush1.xpose.msra.mxu0 0.0
    %289 = vmatprep.subr.mxu0 0.0
    %290 = vmatpush1.xpose.msra.mxu0 0.0
    %291 = vmatprep.subr.mxu0 0.0
    %292 = vmatpush1.xpose.msra.mxu0 0.0
    %293 = vmatprep.subr.mxu0 0.0
    %294 = vmatpush1.xpose.msra.mxu0 0.0
    %295 = vmatprep.subr.mxu0 0.0
    %296 = vmatpush1.xpose.msra.mxu0 0.0
    %297 = vmatprep.subr.mxu0 0.0
    %298 = vmatpush1.xpose.msra.mxu0 0.0
    %299 = vmatprep.subr.mxu0 0.0
    %300 = vmatpush1.xpose.msra.mxu0 0.0
    %301 = vmatprep.subr.mxu0 0.0
    %302 = vmatpush1.xpose.msra.mxu0 0.0
    %303 = vmatprep.subr.mxu0 0.0
    %304 = vmatpush1.xpose.msra.mxu0 0.0
    %305 = vmatprep.subr.mxu0 0.0
    %306 = vmatpush1.xpose.msra.mxu0 0.0
    %307 = vmatprep.subr.mxu0 0.0
    %308 = vmatpush1.xpose.msra.mxu0 0.0
    %309 = vmatprep.subr.mxu0 0.0
    %310 = vmatpush1.xpose.msra.mxu0 0.0
    %311 = vmatprep.subr.mxu0 0.0
    %312 = vmatpush1.xpose.msra.mxu0 0.0
    %313 = vmatprep.subr.mxu0 0.0
    %314 = vmatpush1.xpose.msra.mxu0 0.0
    %315 = vmatprep.mubr.f32.mxu0 0.0
    %316 = vmatmul.mubr.f32.gmra.mrb[0].mxu0 %v246
    %v317 = vpop.f32.mrb[0].mxu0
    %v318 = vadd.f32 %v243, %v317
    %v319 = vpop.f32.mrb[0].mxu0
    %320 = vdwg.mxu0
    %vm321 = vcmask 57344
    %322 = vst.msk [vmem:[#allocation11] sm:$0x1] %vm321, %v318
    // Predicated region
    $region46: #{tpu_custom_call.1} parent=1 // pred_check
      _
    $region47: #{tpu_custom_call.1} parent=1 // pred_check_branch
      %324 = sbr.rel (0) target = $region49
    $region48: #{tpu_custom_call.1} parent=1 // pred_region
      %s326 = ssub.s32 16, 16
      %327 = vsyncadd [#allocation5], %s326
      %s329 = sshll.u32 [#allocation11], 4
      %s330 = int_to_ptr.vmem [resolvable:$true] %s329
      %332 = dma.vmem_to_hbm [thread:$0]  %s330, 16, %s7, [#allocation5]
    $region49: #{tpu_custom_call.1} parent=1 // pred_fallthru
      _
    // Predicated region
    $region50: #{tpu_custom_call.1} parent=1 // pred_check
      _
    $region51: #{tpu_custom_call.1} parent=1 // pred_check_branch
      %334 = sbr.rel (0) target = $region53
    $region52: #{tpu_custom_call.1} parent=1 // pred_region
      %335 = dma.done [#allocation5], 16
    $region53: #{tpu_custom_call.1} parent=1 // pred_fallthru
      _
    %336 = vsyncpa [#allocation4], 1
    %337 = vsyncpa [#allocation7], 1
    %338 = vsyncpa [#allocation10], 1
    %339 = vsyncpa [#allocation5], 1

</llo_original>
